<compile_context>
chip_gen: v7x
topology: tpu7x:2x2x1
jax: 0.10.0
libtpu: 0.0.40
codegen_flags: <defaults>
</compile_context>

<pallas_src>
import functools

import jax
import jax.numpy as jnp
from jax import lax
from jax.experimental import pallas as pl
from jax.experimental.pallas import tpu as pltpu


_VMEM_LIMIT_BYTES = 32 * 1024 * 1024


def _sublane_pack(itemsize: int) -> int:
    return {4: 8, 2: 16, 1: 32}.get(itemsize, 8)


def _tile_target_bytes() -> int:
    """~2 MiB tiles on v5e and older, ~4 MiB on v6e/v7x."""
    try:
        kind = jax.devices()[0].device_kind.lower()
    except Exception:
        return 2 * 1024 * 1024
    if any(v in kind for v in ("v2", "v3", "v4", "v5")):
        return 2 * 1024 * 1024
    return 4 * 1024 * 1024


# ---------------------------------------------------------------------------
# 3-D path: blocks of shape (TB, TH, TW) over a (B, H, W) array.
# ---------------------------------------------------------------------------

def _triu3d_kernel(x_ref, o_ref):
    _, TH, TW = o_ref.shape
    i = pl.program_id(1)
    j = pl.program_id(2)
    row0 = i * TH
    col0 = j * TW

    keep_all = col0 >= row0 + (TH - 1)        # tile fully on/above the diagonal
    drop_all = col0 + (TW - 1) < row0         # tile strictly below the diagonal

    @pl.when(keep_all)
    def _():
        o_ref[...] = x_ref[...]

    @pl.when(drop_all)
    def _():
        # x_ref is never read here; the input index_map aliases drop tiles onto
        # the first block the row needs, so their HBM reads are elided.
        o_ref[...] = jnp.zeros(o_ref.shape, o_ref.dtype)

    @pl.when(jnp.logical_not(jnp.logical_or(keep_all, drop_all)))
    def _():
        x = x_ref[...]
        # Constant (col - row) difference vs. a scalar: one int32 temporary,
        # 2-D and broadcast over the fused batch dim.
        d = (lax.broadcasted_iota(jnp.int32, (1, TH, TW), 2)
             - lax.broadcasted_iota(jnp.int32, (1, TH, TW), 1))
        o_ref[...] = jnp.where(d >= (row0 - col0), x, jnp.zeros_like(x))


def _choose_tiles_3d(B, H, W, itemsize, target_bytes):
    sub = _sublane_pack(itemsize)
    aligned = (W % 128 == 0) and (H % sub == 0)
    if not aligned:
        th, tw = H, W                        # full-extent block (small inputs only)
    else:
        if W >= 2048:
            tw = 1024                        # column-tile: enables read elision
        else:
            tw = W                           # full-width: contiguous, lane-dense
        max_th = max(sub, (target_bytes // (tw * itemsize)) // sub * sub)
        th = min(H, max_th)
    tile_bytes = th * tw * itemsize
    tb = max(1, min(B, target_bytes // max(1, tile_bytes)))
    # Keep the grid non-degenerate so v7x's two TensorCores both get work.
    if pl.cdiv(B, tb) * pl.cdiv(H, th) * pl.cdiv(W, tw) < 2:
        if tb >= 2:
            tb = pl.cdiv(tb, 2)
        elif th % (2 * sub) == 0 and th >= 2 * sub:
            th //= 2
    return tb, th, tw


def _triu_3d(x3, target_bytes, tiles=None):
    B, H, W = x3.shape
    itemsize = x3.dtype.itemsize
    if tiles is None:
        tb, th, tw = _choose_tiles_3d(B, H, W, itemsize, target_bytes)
    else:
        tb, th, tw = tiles
    grid = (pl.cdiv(B, tb), pl.cdiv(H, th), pl.cdiv(W, tw))
    num_j = grid[2]

    if num_j == 1:
        in_index_map = lambda b, i, j: (b, i, j)
    elif (tw & (tw - 1)) == 0:
        # Strictly-below-diagonal tiles alias the first block the row needs;
        # consecutive identical block indices make Pallas skip the input DMA,
        # cutting HBM reads by the below-diagonal fraction.  tw is a power of
        # two here (1024 by default), so j_first is a shift.
        shift = tw.bit_length() - 1
        def in_index_map(b, i, j):
            j_first = (i * th) >> shift
            return (b, i, jnp.minimum(jnp.maximum(j, j_first), num_j - 1))
    else:
        def in_index_map(b, i, j):
            j_first = (i * th) // tw
            return (b, i, jnp.minimum(jnp.maximum(j, j_first), num_j - 1))

    return pl.pallas_call(
        _triu3d_kernel,
        out_shape=jax.ShapeDtypeStruct((B, H, W), x3.dtype),
        grid_spec=pltpu.PrefetchScalarGridSpec(
            num_scalar_prefetch=0,
            grid=grid,
            in_specs=[pl.BlockSpec((tb, th, tw), in_index_map)],
            out_specs=pl.BlockSpec((tb, th, tw), lambda b, i, j: (b, i, j)),
        ),
        compiler_params=pltpu.CompilerParams(
            dimension_semantics=("parallel", "parallel", "parallel"),
            vmem_limit_bytes=_VMEM_LIMIT_BYTES,
        ),
    )(x3)


# ---------------------------------------------------------------------------
# Flat path: W < 128 and a power of two.  The last two dims are flattened so
# stores stay lane-dense (>=128-wide) instead of W-wide masked partials;
# row/col are recovered from the flat index with a shift and a bitwise-and.
# ---------------------------------------------------------------------------

def _triu_flat_kernel(x_ref, o_ref, *, w):
    _, TL = o_ref.shape
    j = pl.program_id(1)
    idx = lax.broadcasted_iota(jnp.int32, (1, TL), 1) + j * TL
    row = idx >> (w.bit_length() - 1)
    col = idx & (w - 1)
    x = x_ref[...]
    o_ref[...] = jnp.where(col >= row, x, jnp.zeros_like(x))


def _choose_tiles_flat(B, L, itemsize, target_bytes):
    sub = _sublane_pack(itemsize)
    cap_l = max(128, (target_bytes // itemsize) // 128 * 128)
    if L % 128 == 0:
        tl = min(L, cap_l)
    elif L > cap_l:
        tl = cap_l                       # ragged lane edge handled by Pallas
    else:
        tl = L                           # full extent
    row_bytes = max(1, tl * itemsize)
    cap_b = max(sub, (target_bytes // row_bytes) // sub * sub)
    tb = min(B, cap_b)                   # either == B (full extent) or sub-aligned
    # Non-degenerate grid (v7x megacore) where cheaply possible.
    if pl.cdiv(B, tb) * pl.cdiv(L, tl) < 2 and tl >= 256:
        tl = ((tl // 2 + 127) // 128) * 128
    return tb, tl


def _triu_flat(x2, w, target_bytes):
    B, L = x2.shape
    tb, tl = _choose_tiles_flat(B, L, x2.dtype.itemsize, target_bytes)
    grid = (pl.cdiv(B, tb), pl.cdiv(L, tl))
    return pl.pallas_call(
        functools.partial(_triu_flat_kernel, w=w),
        out_shape=jax.ShapeDtypeStruct((B, L), x2.dtype),
        grid_spec=pltpu.PrefetchScalarGridSpec(
            num_scalar_prefetch=0,
            grid=grid,
            in_specs=[pl.BlockSpec((tb, tl), lambda b, j: (b, j))],
            out_specs=pl.BlockSpec((tb, tl), lambda b, j: (b, j)),
        ),
        compiler_params=pltpu.CompilerParams(
            dimension_semantics=("parallel", "parallel"),
            vmem_limit_bytes=_VMEM_LIMIT_BYTES,
        ),
    )(x2)


# ---------------------------------------------------------------------------
# Public wrapper
# ---------------------------------------------------------------------------

def triu(x: jax.Array, *, tiles=None) -> jax.Array:
    """out = triu(x): keep element iff col >= row over the last two dims,
    broadcast over leading dims (matches torch.Tensor.triu())."""
    if x.ndim < 2:
        raise ValueError("triu requires at least 2 dims")
    *lead, H, W = x.shape
    B = 1
    for d in lead:
        B *= d
    if B == 0 or H == 0 or W == 0:
        return x

    itemsize = x.dtype.itemsize
    sub = _sublane_pack(itemsize)
    target = _tile_target_bytes()
    x3 = x.reshape(B, H, W)

    aligned = (W % 128 == 0) and (H % sub == 0)
    if aligned:
        out3 = _triu_3d(x3, target, tiles=tiles)
    elif W < 128 and (W & (W - 1)) == 0:
        # Lane-dense fast path for small power-of-two W (e.g. W=16).
        out3 = _triu_flat(x3.reshape(B, H * W), W, target).reshape(B, H, W)
    elif H * W * itemsize <= target:
        # Small unaligned: single full-extent (H, W) block, batch-fused.
        out3 = _triu_3d(x3, target, tiles=tiles)
    else:
        # Large unaligned: pad to (sublane, 128) alignment, tile, slice back.
        # Padding sits below/right of the data, so the triu mask over the
        # original region is unchanged.
        Hp = pl.cdiv(H, sub) * sub
        Wp = pl.cdiv(W, 128) * 128
        xp = jnp.pad(x3, ((0, 0), (0, Hp - H), (0, Wp - W)))
        out3 = _triu_3d(xp, target)[:, :H, :W]

    return out3.reshape(*lead, H, W)


if __name__ == "__main__":
    key = jax.random.PRNGKey(0)

    # Primary demo input (N, C, H, W), exercises the lane-dense flat path.
    x = jax.random.normal(key, (2, 4, 16, 16), dtype=jnp.float32)
    out = jax.block_until_ready(triu(x))
    assert out.shape == x.shape and out.dtype == x.dtype
    assert jnp.allclose(out, jnp.triu(x)), "mismatch vs jnp.triu (flat path)"

    # Aligned tiled path: forces H/W tiling so the copy / zero / masked tile
    # branches and the read-eliding (clamped) input index_map are exercised.
    x2 = jax.random.normal(jax.random.PRNGKey(0), (2, 256, 384), dtype=jnp.float32)
    out2 = jax.block_until_ready(triu(x2, tiles=(1, 64, 128)))
    assert jnp.allclose(out2, jnp.triu(x2)), "mismatch vs jnp.triu (tiled path)"

    # Small unaligned path: full-extent (H, W) blocks with fused batch.
    x3 = jax.random.normal(jax.random.PRNGKey(0), (3, 50, 70), dtype=jnp.float32)
    out3 = jax.block_until_ready(triu(x3))
    assert jnp.allclose(out3, jnp.triu(x3)), "mismatch vs jnp.triu (unaligned path)"

    # Plain 2-D input (no leading dims).
    x4 = jax.random.normal(jax.random.PRNGKey(0), (16, 16), dtype=jnp.float32)
    out4 = jax.block_until_ready(triu(x4))
    assert jnp.allclose(out4, jnp.triu(x4)), "mismatch vs jnp.triu (2-D input)"

    print("KERNEL_OK")
</pallas_src>

<mosaic_0001>
module attributes {stable_mosaic.version = 11 : i64} {
  func.func @_triu_flat_kernel(%arg0: i32, %arg1: i32, %arg2: memref<8x128xf32, #tpu.memory_space<vmem>>, %arg3: memref<8x128xf32, #tpu.memory_space<vmem>>) attributes {dimension_semantics = [#tpu.dimension_semantics<parallel>, #tpu.dimension_semantics<parallel>], iteration_bounds = array<i64: 1, 2>, scalar_prefetch = 0 : i64, scratch_operands = 0 : i64, tpu.core_type = #tpu.core_type<tc>, window_params = [{transform_indices = @transform_0, window_bounds = array<i64: 8, 128>}, {transform_indices = @transform_1, window_bounds = array<i64: 8, 128>}]} {
    %0 = tpu.iota {dimensions = array<i32: 1>} : vector<1x128xi32>
    %c128_i32 = arith.constant 128 : i32
    %1 = arith.muli %arg1, %c128_i32 : i32
    %2 = vector.broadcast %1 : i32 to vector<1x128xi32>
    %3 = arith.addi %0, %2 : vector<1x128xi32>
    %c4_i32 = arith.constant 4 : i32
    %4 = vector.broadcast %c4_i32 : i32 to vector<1x128xi32>
    %5 = arith.shrsi %3, %4 : vector<1x128xi32>
    %c15_i32 = arith.constant 15 : i32
    %6 = vector.broadcast %c15_i32 : i32 to vector<1x128xi32>
    %7 = arith.andi %3, %6 : vector<1x128xi32>
    %c0 = arith.constant 0 : index
    %c0_0 = arith.constant 0 : index
    %8 = vector.load %arg2[%c0, %c0_0] : memref<8x128xf32, #tpu.memory_space<vmem>>, vector<8x128xf32>
    %9 = arith.cmpi sge, %7, %5 : vector<1x128xi32>
    %cst = arith.constant 0.000000e+00 : f32
    %10 = vector.broadcast %cst : f32 to vector<8x128xf32>
    %11 = vector.shape_cast %9 : vector<1x128xi1> to vector<1x128xi1>
    %12 = vector.broadcast %11 : vector<1x128xi1> to vector<8x128xi1>
    %13 = arith.select %12, %8, %10 : vector<8x128xi1>, vector<8x128xf32>
    %c0_1 = arith.constant 0 : index
    %c0_2 = arith.constant 0 : index
    %14 = vector.load %arg3[%c0_1, %c0_2] : memref<8x128xf32, #tpu.memory_space<vmem>>, vector<8x128xf32>
    tpu.vector_store %arg3[%c0_1, %c0_2], %13 {strides = array<i32>} : memref<8x128xf32, #tpu.memory_space<vmem>>, vector<8x128xf32>,
    return
  }
  func.func @transform_0(%arg0: i32, %arg1: i32) -> (i32, i32) {
    %c0_i32 = arith.constant 0 : i32
    return %arg0, %arg1 : i32, i32
  }
  func.func @transform_1(%arg0: i32, %arg1: i32) -> (i32, i32) {
    %c0_i32 = arith.constant 0 : i32
    return %arg0, %arg1 : i32, i32
  }
}

</mosaic_0001>

<llo_original>
// kernel: tpu_custom_call.1
$region0: #{tpu_custom_call.1}
  #allocation0 [shape = 'u32[]', space=smem, size = 0x4, offset = 0x4, fixed_abs, tag = 'smem constant byte address 0x4 - core index']
  #allocation1 [shape = 'u32[144,128]{1,0:T(1,128)}', space=vmem, size = 0x12000, scoped, tag = 'internal scratch']
  %s0 = inlined_call_operand.hbm [shape: f32[8,256], index: 0, kind: input, shape index: {}]
  %s1 = inlined_call_operand.hbm [shape: f32[8,256], index: 1, kind: output, shape index: {}]
  %s2 = sld [smem:[#allocation0]]
  $region41: #{tpu_custom_call.1} parent=0
    _
  %s4 = ssub.s32 1, %s2
  %s5 = scalar_select 0, %s4, %s2
  $region1: #{tpu_custom_call.1} parent=0
    #allocation2 [shape = 'u8[8192]{0}', space=vmem, size = 0x2000, scoped, tag = 'input window, operand 0']
    #allocation3 [shape = 's32[2]{0}', space=sflag, size = 0x8, scoped, tag = 'scoped memory for tpu_custom_call.1']
    #allocation4 [shape = 's32[2]{0}', space=sflag, size = 0x8, scoped, tag = 'scoped memory for tpu_custom_call.1']
    #allocation5 [shape = 'u8[8192]{0}', space=vmem, size = 0x2000, scoped, tag = 'output window, operand 0']
    %6 = vsyncpa [#allocation3], 0
    %s7 = scalar_lea.sflag [#allocation3], 1
    %8 = vsyncpa %s7, 0
    %9 = vsyncpa [#allocation4], 0
    %s10 = scalar_lea.sflag [#allocation4], 1
    %11 = vsyncpa %s10, 0
    loop: start=0, step=1, limit=4
    $region2: #{tpu_custom_call.1} parent=1 // loop_pre_header
      _
    $region3: #{tpu_custom_call.1} parent=1 // loop_header
      %s13 = sphi 0, %s17
      %p14 = scmp.ge.s32.totalorder %s13, 4
      %s20 = sphi 0, %s32
      %s21 = sphi 0, %s28
      %s22 = sphi 0, %s20
      %s23 = sphi 0, %s21
      %s24 = sphi 0, %s22
      %s25 = sphi 0, %s23
      %s37 = sphi 0, %s39
      %s40 = sphi 0, %s37
      %s41 = sphi 0, %s40
      %s57 = sphi 0, %s41
      %s65 = sphi 0, %s67
      %s68 = sphi 0, %s65
      %s69 = sphi 0, %s68
      %s85 = sphi 0, %s69
    $region4: #{tpu_custom_call.1} parent=1 // loop_header_branch
      %16 = sbr.rel (%p14) target = $region8
    $region5: #{tpu_custom_call.1} parent=1 // loop_body
      %s18 = ssub.s32 %s13, 1
      %s19 = ssub.s32 %s13, 2
      %s26 = sadd.s32 1, %s21
      %p27 = scmp.ge.s32.totalorder %s26, 2
      %s28 = scalar_select %p27, 0, %s26
      %s29 = sadd.s32 1, %s20
      %s30 = scalar_select %p27, %s29, %s20
      %p31 = scmp.ge.s32.totalorder %s30, 1
      %s32 = scalar_select %p31, 0, %s30
      %s33 = ssub.s32 %s20, %s32
      %s34 = ssub.s32 %s21, %s28
      %s35 = sor.u32 %s33, %s34
      %p36 = scmp.eq.s32.totalorder %s35, 0
      %s38 = sadd.s32 %s37, 1
      %s39 = scalar_select %p36, %s37, %s38
      %p42 = pneg %p36
      %p43 = scmp.eq.s32.totalorder %s13, 1
      %p44 = por %p42, %p43
      %p45 = scmp.ne.s32.totalorder %s37, %s40
      %p46 = scmp.eq.s32.totalorder %s13, 0
      %p47 = por %p45, %p46
      %p48 = scmp.ne.s32.totalorder %s37, %s40
      %p49 = scmp.eq.s32.totalorder %s18, 1
      %p50 = por %p48, %p49
      %p51 = scmp.ne.s32.totalorder %s40, %s41
      %p52 = scmp.eq.s32.totalorder %s18, 0
      %p53 = por %p51, %p52
      %p54 = scmp.ne.s32.totalorder %s40, %s41
      %p55 = scmp.eq.s32.totalorder %s19, 1
      %p56 = por %p54, %p55
      %p58 = scmp.ne.s32.totalorder %s41, %s57
      %p59 = scmp.eq.s32.totalorder %s19, 0
      %p60 = por %p58, %p59
      %s61 = ssub.s32 %s20, %s32
      %s62 = ssub.s32 %s21, %s28
      %s63 = sor.u32 %s61, %s62
      %p64 = scmp.eq.s32.totalorder %s63, 0
      %s66 = sadd.s32 %s65, 1
      %s67 = scalar_select %p64, %s65, %s66
      %p70 = pneg %p64
      %p71 = scmp.eq.s32.totalorder %s13, 1
      %p72 = por %p70, %p71
      %p73 = scmp.ne.s32.totalorder %s65, %s68
      %p74 = scmp.eq.s32.totalorder %s13, 0
      %p75 = por %p73, %p74
      %p76 = scmp.ne.s32.totalorder %s65, %s68
      %p77 = scmp.eq.s32.totalorder %s18, 1
      %p78 = por %p76, %p77
      %p79 = scmp.ne.s32.totalorder %s68, %s69
      %p80 = scmp.eq.s32.totalorder %s18, 0
      %p81 = por %p79, %p80
      %p82 = scmp.ne.s32.totalorder %s68, %s69
      %p83 = scmp.eq.s32.totalorder %s19, 1
      %p84 = por %p82, %p83
      %p86 = scmp.ne.s32.totalorder %s69, %s85
      %p87 = scmp.eq.s32.totalorder %s19, 0
      %p88 = por %p86, %p87
      %p89 = scmp.le.s32.totalorder 1, %s13
      %p90 = scmp.lt.s32.totalorder %s13, 3
      %p91 = pnand %p89, %p90
      %p92 = pneg %p91
      // Predicated region
      $region9: #{tpu_custom_call.1} parent=5 // pred_check
        _
      $region10: #{tpu_custom_call.1} parent=5 // pred_check_branch
        %94 = sbr.rel (%p91) target = $region12
      $region11: #{tpu_custom_call.1} parent=5 // pred_region
        %s95 = ssub.s32 %s13, 1
      $region12: #{tpu_custom_call.1} parent=5 // pred_fallthru
        _
      %p96 = scmp.lt.s32.totalorder %s13, 2
      // Predicated region
      $region13: #{tpu_custom_call.1} parent=5 // pred_check
        %p97 = pneg %p96
      $region14: #{tpu_custom_call.1} parent=5 // pred_check_branch
        %99 = sbr.rel (%p97) target = $region16
      $region15: #{tpu_custom_call.1} parent=5 // pred_region
        // Predicated region
        $region17: #{tpu_custom_call.1} parent=15 // pred_check
          %p100 = pneg %p47
        $region18: #{tpu_custom_call.1} parent=15 // pred_check_branch
          %102 = sbr.rel (%p100) target = $region20
        $region19: #{tpu_custom_call.1} parent=15 // pred_region
          %s103 = sand.u32 %s37, 1
          %s104 = scalar_lea.sflag [#allocation3], %s103
          %s105 = sand.u32 %s37, 1
          %s106 = smul.addr %s105, 8
          %s107 = scalar_lea.vmem [#allocation2], %s106
          %s109 = ssub.s32 128, 128
          %110 = vsyncadd %s104, %s109
          %s111 = smul.addr %s20, 2
          %s112 = sadd.s32 %s21, %s111
          %s113 = smul.addr %s112, 128
          %s114 = scalar_lea.hbm %s0, %s113
          %s116 = sshll.u32 %s107, 4
          %s117 = int_to_ptr.vmem [resolvable:$true] %s116
          %119 = dma.hbm_to_vmem [thread:$0]  %s114, 128, %s117, %s104
        $region20: #{tpu_custom_call.1} parent=15 // pred_fallthru
          _
      $region16: #{tpu_custom_call.1} parent=5 // pred_fallthru
        _
      %p120 = scmp.le.s32.totalorder 1, %s13
      %p121 = scmp.lt.s32.totalorder %s13, 3
      %p122 = pnand %p120, %p121
      %p123 = pneg %p122
      // Predicated region
      $region21: #{tpu_custom_call.1} parent=5 // pred_check
        _
      $region22: #{tpu_custom_call.1} parent=5 // pred_check_branch
        %125 = sbr.rel (%p122) target = $region24
      $region23: #{tpu_custom_call.1} parent=5 // pred_region
        %s126 = ssub.s32 %s13, 1
        %s127 = sand.u32 %s40, 1
        %s128 = scalar_lea.sflag [#allocation3], %s127
        %s129 = sand.u32 %s40, 1
        %s130 = smul.addr %s129, 8
        %s131 = scalar_lea.vmem [#allocation2], %s130
        // Predicated region
        $region25: #{tpu_custom_call.1} parent=23 // pred_check
          %p132 = pneg %p53
        $region26: #{tpu_custom_call.1} parent=23 // pred_check_branch
          %134 = sbr.rel (%p132) target = $region28
        $region27: #{tpu_custom_call.1} parent=23 // pred_region
          %135 = dma.done %s128, 128
        $region28: #{tpu_custom_call.1} parent=23 // pred_fallthru
          _
        %s136 = sand.u32 %s40, 1
        %s137 = scalar_lea.sflag [#allocation3], %s136
        %s138 = sand.u32 %s40, 1
        %s139 = smul.addr %s138, 8
        %s140 = scalar_lea.vmem [#allocation2], %s139
        %p141 = pneg %p53
        %p142 = pneg %p50
        %p143 = pneg %p81
        %p144 = pneg %p78
        %s145 = sand.u32 %s68, 1
        %s146 = scalar_lea.sflag [#allocation4], %s145
        %s147 = sand.u32 %s68, 1
        %s148 = smul.addr %s147, 8
        %s149 = scalar_lea.vmem [#allocation5], %s148
        %v150 = vlaneseq
        %v151 = vand.u32 %v150, 127
        %s152 = smul.u32 %s23, 128
        %v153 = vstv %s152
        %v154 = vadd.s32 %v151, %v153
        %v155 = vshra.s32 %v154, 4
        %v156 = vand.u32 %v154, 15
        %v157 = vld [vmem:[%s131] sm:$0xff]
        %vm158 = vcmp.ge.s32.totalorder %v156, %v155
        %v159 = vsel %vm158, 1, 0
        %vm160 = vcmp.eq.s32.totalorder %v159, 1
        %v161 = vsel %vm160, %v157, 0.0
        %162 = vst [vmem:[%s149] sm:$0xff] %v161
        %s163 = sand.u32 %s68, 1
        %s164 = scalar_lea.sflag [#allocation4], %s163
        %s165 = sand.u32 %s68, 1
        %s166 = smul.addr %s165, 8
        %s167 = scalar_lea.vmem [#allocation5], %s166
        // Predicated region
        $region29: #{tpu_custom_call.1} parent=23 // pred_check
          %p168 = pneg %p78
        $region30: #{tpu_custom_call.1} parent=23 // pred_check_branch
          %170 = sbr.rel (%p168) target = $region32
        $region31: #{tpu_custom_call.1} parent=23 // pred_region
          %s172 = ssub.s32 128, 128
          %173 = vsyncadd %s164, %s172
          %s174 = smul.addr %s22, 2
          %s175 = sadd.s32 %s23, %s174
          %s176 = smul.addr %s175, 128
          %s177 = scalar_lea.hbm %s1, %s176
          %s179 = sshll.u32 %s167, 4
          %s180 = int_to_ptr.vmem [resolvable:$true] %s179
          %182 = dma.vmem_to_hbm [thread:$0]  %s180, 128, %s177, %s164
        $region32: #{tpu_custom_call.1} parent=23 // pred_fallthru
          _
      $region24: #{tpu_custom_call.1} parent=5 // pred_fallthru
        _
      %p183 = scmp.le.s32.totalorder 2, %s13
      // Predicated region
      $region33: #{tpu_custom_call.1} parent=5 // pred_check
        %p184 = pneg %p183
      $region34: #{tpu_custom_call.1} parent=5 // pred_check_branch
        %186 = sbr.rel (%p184) target = $region36
      $region35: #{tpu_custom_call.1} parent=5 // pred_region
        %s187 = ssub.s32 %s13, 2
        // Predicated region
        $region37: #{tpu_custom_call.1} parent=35 // pred_check
          %p188 = pneg %p84
        $region38: #{tpu_custom_call.1} parent=35 // pred_check_branch
          %190 = sbr.rel (%p188) target = $region40
        $region39: #{tpu_custom_call.1} parent=35 // pred_region
          %s191 = sand.u32 %s69, 1
          %s192 = scalar_lea.sflag [#allocation4], %s191
          %s193 = sand.u32 %s69, 1
          %s194 = smul.addr %s193, 8
          %s195 = scalar_lea.vmem [#allocation5], %s194
          %196 = dma.done %s192, 128
        $region40: #{tpu_custom_call.1} parent=35 // pred_fallthru
          _
      $region36: #{tpu_custom_call.1} parent=5 // pred_fallthru
        _
    $region6: #{tpu_custom_call.1} parent=1 // loop_footer
      %s17 = sadd.s32 1, %s13
    $region7: #{tpu_custom_call.1} parent=1 // loop_footer_branch
      %12 = sbr.rel target = $region3
    $region8: #{tpu_custom_call.1} parent=1 // loop_exit
      _
    %197 = vsyncpa [#allocation3], 1
    %s198 = scalar_lea.sflag [#allocation3], 1
    %199 = vsyncpa %s198, 1
    %200 = vsyncpa [#allocation4], 1
    %s201 = scalar_lea.sflag [#allocation4], 1
    %202 = vsyncpa %s201, 1

</llo_original>
